<compile_context>
chip_gen: v7x
topology: tpu7x:2x2x1
jax: 0.10.0
libtpu: 0.0.40
codegen_flags: <defaults>
</compile_context>

<pallas_src>
import functools

import jax
import jax.numpy as jnp
from jax.experimental import pallas as pl
from jax.experimental.pallas import tpu as pltpu

_LANE = 128


def _bce_dice_kernel(pred_ref, targ_ref, out_ref, *, n_rows, block_rows,
                     has_partial):
    x = pred_ref[...].astype(jnp.float32)          # (block_rows, 128)
    t = targ_ref[...].astype(jnp.float32)          # bf16/int8/bool -> f32 under DMA

    # sigmoid(x) = 0.5*(1 + tanh(x/2)): a single EUP op, no divide.
    p = 0.5 * jnp.tanh(0.5 * x) + 0.5

    def emit(pv, tv, m=None):
        # BCEWithLogits(p, t) with p = sigmoid(pred) in [0, 1]:
        #   max(p,0) - p*t + log1p(exp(-|p|)) = p - p*t + log1p(exp(-p))
        logt = jnp.log1p(jnp.exp(-pv))
        if m is not None:
            logt = jnp.where(m, logt, 0.0)
        out_ref[0:1, :] = jnp.sum(pv, axis=0, keepdims=True)
        out_ref[1:2, :] = jnp.sum(pv * tv, axis=0, keepdims=True)
        out_ref[2:3, :] = jnp.sum(tv, axis=0, keepdims=True)
        out_ref[3:4, :] = jnp.sum(logt, axis=0, keepdims=True)

    if has_partial:
        # Only the last block is partial; every other block takes the
        # mask-free fast path (no iota / compare / select work).
        valid = n_rows - pl.program_id(0) * block_rows
        is_full = valid >= block_rows

        @pl.when(is_full)
        def _():
            emit(p, t)

        @pl.when(jnp.logical_not(is_full))
        def _():
            # Out-of-bounds rows of a partial block are undefined (may even be
            # NaN bit patterns): mask with select, not multiply.
            row = jax.lax.broadcasted_iota(jnp.int32, (block_rows, _LANE), 0)
            m = row < valid
            emit(jnp.where(m, p, 0.0), jnp.where(m, t, 0.0), m)
    else:
        emit(p, t)


def bce_dice_loss(pred, target, smooth=1e-5, max_block_rows=2048):
    """Pallas-TPU implementation of BCEDiceLoss.forward. Returns a scalar."""
    n = pred.size

    pf = pred.reshape(-1)
    if pf.dtype != jnp.float32 and pf.dtype != jnp.bfloat16:
        pf = pf.astype(jnp.float32)

    tf = target.reshape(-1)
    if tf.dtype.itemsize == 1:
        pass   # int8 / uint8 / bool: 1-byte HBM stream, upcast in-kernel (no host copy)
    elif tf.dtype != jnp.float32 and tf.dtype != jnp.bfloat16:
        tf = tf.astype(jnp.float32)

    rows = n // _LANE
    rem = n - rows * _LANE

    sums = jnp.zeros((4,), jnp.float32)   # [sum_p, sum_pt, sum_t, sum_log1p]

    if rows > 0:
        # Second-minor alignment for the narrowest stream (f32:8, bf16:16, 1B:32).
        align = 8
        if pf.dtype.itemsize == 2 or tf.dtype.itemsize == 2:
            align = 16
        if pf.dtype.itemsize == 1 or tf.dtype.itemsize == 1:
            align = 32

        if rows <= max_block_rows:
            block_rows = rows                     # block == full array: always legal
        else:
            block_rows = max((max_block_rows // align) * align, align)

        grid = pl.cdiv(rows, block_rows)
        has_partial = (rows % block_rows) != 0

        if rem:
            P = pf[:rows * _LANE].reshape(rows, _LANE)
            T = tf[:rows * _LANE].reshape(rows, _LANE)
        else:
            P = pf.reshape(rows, _LANE)
            T = tf.reshape(rows, _LANE)

        kernel = functools.partial(_bce_dice_kernel, n_rows=rows,
                                   block_rows=block_rows,
                                   has_partial=has_partial)
        blk = pl.BlockSpec((block_rows, _LANE), lambda i: (i, 0))

        parts = pl.pallas_call(
            kernel,
            out_shape=jax.ShapeDtypeStruct((grid, 4, _LANE), jnp.float32),
            grid_spec=pltpu.PrefetchScalarGridSpec(
                num_scalar_prefetch=0,
                grid=(grid,),
                in_specs=[blk, blk],
                out_specs=pl.BlockSpec((None, 4, _LANE), lambda i: (i, 0, 0)),
            ),
            compiler_params=pltpu.CompilerParams(
                dimension_semantics=("parallel",),
                vmem_limit_bytes=32 * 1024 * 1024),
        )(P, T)
        sums = sums + jnp.sum(parts, axis=(0, 2))

    if rem:
        # Sub-128-element tail: negligible work, done in plain JAX (no pad copy).
        xt = pf[rows * _LANE:].astype(jnp.float32)
        tt = tf[rows * _LANE:].astype(jnp.float32)
        pt = jax.nn.sigmoid(xt)
        sums = sums + jnp.stack([jnp.sum(pt), jnp.sum(pt * tt), jnp.sum(tt),
                                 jnp.sum(jnp.log1p(jnp.exp(-pt)))])

    sum_p, sum_pt, sum_t, sum_log = sums[0], sums[1], sums[2], sums[3]
    bce_mean = (sum_p - sum_pt + sum_log) / n
    dice = 1.0 - (2.0 * sum_pt + smooth) / (sum_p + sum_t + smooth)
    return 0.5 * bce_mean + 0.5 * dice


def _reference(pred, target, smooth=1e-5):
    # Pure-JAX reference mirroring the PyTorch module line-by-line.
    p = jax.nn.sigmoid(pred.astype(jnp.float32))
    t = target.astype(jnp.float32)
    bce = jnp.mean(jnp.maximum(p, 0.0) - p * t + jnp.log1p(jnp.exp(-jnp.abs(p))))
    pf = p.reshape(-1)
    tf = t.reshape(-1)
    inter = jnp.sum(pf * tf)
    dice = 1.0 - (2.0 * inter + smooth) / (jnp.sum(pf) + jnp.sum(tf) + smooth)
    return 0.5 * bce + 0.5 * dice


if __name__ == "__main__":
    key = jax.random.PRNGKey(0)
    k1, k2, k3, k4 = jax.random.split(key, 4)

    # 1) Canonical f32 pred + f32 target (NCHW segmentation-style shape).
    pred = jax.random.normal(k1, (2, 4, 16, 16), dtype=jnp.float32)
    target = (jax.random.uniform(k2, (2, 4, 16, 16)) > 0.5).astype(jnp.float32)
    loss = jax.block_until_ready(bce_dice_loss(pred, target))
    ref = _reference(pred, target)
    assert jnp.allclose(loss, ref, rtol=1e-5, atol=1e-5), (loss, ref)

    # 2) bf16 pred + int8 target: half-/quarter-width HBM streams, upcast in-kernel.
    pred2 = jax.random.normal(k3, (2, 4, 32, 32), dtype=jnp.float32).astype(jnp.bfloat16)
    targ2 = (jax.random.uniform(k4, (2, 4, 32, 32)) > 0.5).astype(jnp.int8)
    loss2 = jax.block_until_ready(bce_dice_loss(pred2, targ2))
    ref2 = _reference(pred2.astype(jnp.float32), targ2.astype(jnp.float32))
    assert jnp.allclose(loss2, ref2, rtol=1e-4, atol=1e-4), (loss2, ref2)

    # 3) Ragged size: exercises the in-kernel partial-block mask and the JAX tail.
    pred3 = jax.random.normal(k1, (3, 5, 7, 11), dtype=jnp.float32)
    targ3 = (jax.random.uniform(k2, (3, 5, 7, 11)) > 0.5).astype(jnp.float32)
    loss3 = jax.block_until_ready(bce_dice_loss(pred3, targ3, max_block_rows=8))
    ref3 = _reference(pred3, targ3)
    assert jnp.allclose(loss3, ref3, rtol=1e-5, atol=1e-5), (loss3, ref3)

    print("KERNEL_OK")
</pallas_src>

<mosaic_0001>
module attributes {stable_mosaic.version = 11 : i64} {
  func.func @_bce_dice_kernel(%arg0: i32, %arg1: memref<16x128xf32, #tpu.memory_space<vmem>>, %arg2: memref<16x128xf32, #tpu.memory_space<vmem>>, %arg3: memref<1x4x128xf32, #tpu.memory_space<vmem>>) attributes {dimension_semantics = [#tpu.dimension_semantics<parallel>], iteration_bounds = array<i64: 1>, scalar_prefetch = 0 : i64, scratch_operands = 0 : i64, tpu.core_type = #tpu.core_type<tc>, window_params = [{transform_indices = @transform_0, window_bounds = array<i64: 16, 128>}, {transform_indices = @transform_1, window_bounds = array<i64: 16, 128>}, {transform_indices = @transform_2, window_bounds = array<i64: 1, 4, 128>}]} {
    %c0 = arith.constant 0 : index
    %c0_0 = arith.constant 0 : index
    %0 = vector.load %arg1[%c0, %c0_0] : memref<16x128xf32, #tpu.memory_space<vmem>>, vector<16x128xf32>
    %c0_1 = arith.constant 0 : index
    %c0_2 = arith.constant 0 : index
    %1 = vector.load %arg2[%c0_1, %c0_2] : memref<16x128xf32, #tpu.memory_space<vmem>>, vector<16x128xf32>
    %cst = arith.constant 5.000000e-01 : f32
    %2 = vector.broadcast %cst : f32 to vector<16x128xf32>
    %3 = arith.mulf %2, %0 : vector<16x128xf32>
    %4 = math.tanh %3 : vector<16x128xf32>
    %cst_3 = arith.constant 5.000000e-01 : f32
    %5 = vector.broadcast %cst_3 : f32 to vector<16x128xf32>
    %6 = arith.mulf %5, %4 : vector<16x128xf32>
    %cst_4 = arith.constant 5.000000e-01 : f32
    %7 = vector.broadcast %cst_4 : f32 to vector<16x128xf32>
    %8 = arith.addf %6, %7 : vector<16x128xf32>
    %cst_5 = arith.constant 0.000000e+00 : f32
    %9 = vector.broadcast %cst_5 : f32 to vector<16x128xf32>
    %10 = arith.subf %9, %8 : vector<16x128xf32>
    %11 = math.exp %10 : vector<16x128xf32>
    %12 = math.log1p %11 : vector<16x128xf32>
    %cst_6 = arith.constant dense<0.000000e+00> : vector<128xf32>
    %13 = vector.multi_reduction <add>, %8, %cst_6 [0] : vector<16x128xf32> to vector<128xf32>
    %14 = vector.shape_cast %13 : vector<128xf32> to vector<1x128xf32>
    %c0_7 = arith.constant 0 : index
    %c0_8 = arith.constant 0 : index
    %c0_9 = arith.constant 0 : index
    %15 = vector.load %arg3[%c0_7, %c0_8, %c0_9] : memref<1x4x128xf32, #tpu.memory_space<vmem>>, vector<1x1x128xf32>
    %16 = vector.shape_cast %15 : vector<1x1x128xf32> to vector<1x128xf32>
    %17 = vector.shape_cast %14 : vector<1x128xf32> to vector<1x1x128xf32>
    tpu.vector_store %arg3[%c0_7, %c0_8, %c0_9], %17 {strides = array<i32>} : memref<1x4x128xf32, #tpu.memory_space<vmem>>, vector<1x1x128xf32>,
    %18 = arith.mulf %8, %1 : vector<16x128xf32>
    %cst_10 = arith.constant dense<0.000000e+00> : vector<128xf32>
    %19 = vector.multi_reduction <add>, %18, %cst_10 [0] : vector<16x128xf32> to vector<128xf32>
    %20 = vector.shape_cast %19 : vector<128xf32> to vector<1x128xf32>
    %c0_11 = arith.constant 0 : index
    %c1 = arith.constant 1 : index
    %c0_12 = arith.constant 0 : index
    %21 = vector.load %arg3[%c0_11, %c1, %c0_12] : memref<1x4x128xf32, #tpu.memory_space<vmem>>, vector<1x1x128xf32>
    %22 = vector.shape_cast %21 : vector<1x1x128xf32> to vector<1x128xf32>
    %23 = vector.shape_cast %20 : vector<1x128xf32> to vector<1x1x128xf32>
    tpu.vector_store %arg3[%c0_11, %c1, %c0_12], %23 {strides = array<i32>} : memref<1x4x128xf32, #tpu.memory_space<vmem>>, vector<1x1x128xf32>,
    %cst_13 = arith.constant dense<0.000000e+00> : vector<128xf32>
    %24 = vector.multi_reduction <add>, %1, %cst_13 [0] : vector<16x128xf32> to vector<128xf32>
    %25 = vector.shape_cast %24 : vector<128xf32> to vector<1x128xf32>
    %c0_14 = arith.constant 0 : index
    %c2 = arith.constant 2 : index
    %c0_15 = arith.constant 0 : index
    %26 = vector.load %arg3[%c0_14, %c2, %c0_15] : memref<1x4x128xf32, #tpu.memory_space<vmem>>, vector<1x1x128xf32>
    %27 = vector.shape_cast %26 : vector<1x1x128xf32> to vector<1x128xf32>
    %28 = vector.shape_cast %25 : vector<1x128xf32> to vector<1x1x128xf32>
    tpu.vector_store %arg3[%c0_14, %c2, %c0_15], %28 {strides = array<i32>} : memref<1x4x128xf32, #tpu.memory_space<vmem>>, vector<1x1x128xf32>,
    %cst_16 = arith.constant dense<0.000000e+00> : vector<128xf32>
    %29 = vector.multi_reduction <add>, %12, %cst_16 [0] : vector<16x128xf32> to vector<128xf32>
    %30 = vector.shape_cast %29 : vector<128xf32> to vector<1x128xf32>
    %c0_17 = arith.constant 0 : index
    %c3 = arith.constant 3 : index
    %c0_18 = arith.constant 0 : index
    %31 = vector.load %arg3[%c0_17, %c3, %c0_18] : memref<1x4x128xf32, #tpu.memory_space<vmem>>, vector<1x1x128xf32>
    %32 = vector.shape_cast %31 : vector<1x1x128xf32> to vector<1x128xf32>
    %33 = vector.shape_cast %30 : vector<1x128xf32> to vector<1x1x128xf32>
    tpu.vector_store %arg3[%c0_17, %c3, %c0_18], %33 {strides = array<i32>} : memref<1x4x128xf32, #tpu.memory_space<vmem>>, vector<1x1x128xf32>,
    return
  }
  func.func @transform_0(%arg0: i32) -> (i32, i32) {
    %c0_i32 = arith.constant 0 : i32
    %c0_i32_0 = arith.constant 0 : i32
    return %arg0, %c0_i32 : i32, i32
  }
  func.func @transform_1(%arg0: i32) -> (i32, i32) {
    %c0_i32 = arith.constant 0 : i32
    %c0_i32_0 = arith.constant 0 : i32
    return %arg0, %c0_i32 : i32, i32
  }
  func.func @transform_2(%arg0: i32) -> (i32, i32, i32) {
    %c0_i32 = arith.constant 0 : i32
    %c0_i32_0 = arith.constant 0 : i32
    %c0_i32_1 = arith.constant 0 : i32
    return %arg0, %c0_i32, %c0_i32_0 : i32, i32, i32
  }
}

</mosaic_0001>

<llo_original>
// kernel: tpu_custom_call.1
$region0: #{tpu_custom_call.1}
  #allocation0 [shape = 'u32[]', space=smem, size = 0x4, offset = 0x4, fixed_abs, tag = 'smem constant byte address 0x4 - core index']
  #allocation1 [shape = 'u32[144,128]{1,0:T(1,128)}', space=vmem, size = 0x12000, scoped, tag = 'internal scratch']
  %s0 = inlined_call_operand.hbm [shape: f32[16,128], index: 0, kind: input, shape index: {}]
  %s1 = inlined_call_operand.hbm [shape: f32[16,128], index: 1, kind: input, shape index: {}]
  %s2 = inlined_call_operand.hbm [shape: f32[1,4,128], index: 2, kind: output, shape index: {}]
  %s3 = sld [smem:[#allocation0]]
  $region26: #{tpu_custom_call.1} parent=0
    _
  %s5 = ssub.s32 1, %s3
  %s6 = scalar_select 0, %s5, %s3
  $region1: #{tpu_custom_call.1} parent=0
    #allocation2 [shape = 'u8[8192]{0}', space=vmem, size = 0x2000, scoped, tag = 'input window, operand 0, single buffered']
    #allocation3 [shape = 's32[1]{0}', space=sflag, size = 0x4, scoped, tag = 'scoped memory for tpu_custom_call.1']
    #allocation4 [shape = 's32[1]{0}', space=sflag, size = 0x4, scoped, tag = 'scoped memory for tpu_custom_call.1']
    #allocation5 [shape = 'u8[8192]{0}', space=vmem, size = 0x2000, scoped, tag = 'input window, operand 1, single buffered']
    #allocation6 [shape = 's32[1]{0}', space=sflag, size = 0x4, scoped, tag = 'scoped memory for tpu_custom_call.1']
    #allocation7 [shape = 'u8[2048]{0}', space=vmem, size = 0x800, scoped, tag = 'output window, operand 0, single buffered']
    %7 = vsyncpa [#allocation3], 0
    %8 = vsyncpa [#allocation6], 0
    %9 = vsyncpa [#allocation4], 0
    // Predicated region
    $region2: #{tpu_custom_call.1} parent=1 // pred_check
      _
    $region3: #{tpu_custom_call.1} parent=1 // pred_check_branch
      %11 = sbr.rel (0) target = $region5
    $region4: #{tpu_custom_call.1} parent=1 // pred_region
      %s13 = ssub.s32 256, 256
      %14 = vsyncadd [#allocation3], %s13
      %s15 = sshll.u32 [#allocation2], 4
      %s16 = int_to_ptr.vmem [resolvable:$true] %s15
      %21 = dma.hbm_to_vmem [thread:$0]  %s0, 256, %s16, [#allocation3], 128, 128, 8
    $region5: #{tpu_custom_call.1} parent=1 // pred_fallthru
      _
    // Predicated region
    $region6: #{tpu_custom_call.1} parent=1 // pred_check
      _
    $region7: #{tpu_custom_call.1} parent=1 // pred_check_branch
      %23 = sbr.rel (0) target = $region9
    $region8: #{tpu_custom_call.1} parent=1 // pred_region
      %s25 = ssub.s32 256, 256
      %26 = vsyncadd [#allocation6], %s25
      %s27 = sshll.u32 [#allocation5], 4
      %s28 = int_to_ptr.vmem [resolvable:$true] %s27
      %33 = dma.hbm_to_vmem [thread:$0]  %s1, 256, %s28, [#allocation6], 128, 128, 8
    $region9: #{tpu_custom_call.1} parent=1 // pred_fallthru
      _
    // Predicated region
    $region10: #{tpu_custom_call.1} parent=1 // pred_check
      _
    $region11: #{tpu_custom_call.1} parent=1 // pred_check_branch
      %35 = sbr.rel (0) target = $region13
    $region12: #{tpu_custom_call.1} parent=1 // pred_region
      %36 = dma.done [#allocation3], 256
    $region13: #{tpu_custom_call.1} parent=1 // pred_fallthru
      _
    // Predicated region
    $region14: #{tpu_custom_call.1} parent=1 // pred_check
      _
    $region15: #{tpu_custom_call.1} parent=1 // pred_check_branch
      %38 = sbr.rel (0) target = $region17
    $region16: #{tpu_custom_call.1} parent=1 // pred_region
      %39 = dma.done [#allocation6], 256
    $region17: #{tpu_custom_call.1} parent=1 // pred_fallthru
      _
    %v40 = vld [vmem:[#allocation2] sm:$0xff]
    %v41 = vld [vmem:[#allocation2 + $0x8] sm:$0xff]
    %v42 = vld [vmem:[#allocation5] sm:$0xff]
    %v43 = vld [vmem:[#allocation5 + $0x8] sm:$0xff]
    %v44 = vmul.f32 %v40, 0.5
    %v45 = vmul.f32 %v41, 0.5
    %v46 = vtanh.pop %v44
    %v47 = vtanh.pop %v45
    %v48 = vmul.f32 %v46, 0.5
    %v49 = vmul.f32 %v47, 0.5
    %v50 = vadd.f32 %v48, 0.5
    %v51 = vadd.f32 %v49, 0.5
    %v52 = vsub.f32 0.0, %v50
    %v53 = vsub.f32 0.0, %v51
    %v54 = vmul.f32 %v52, 1.442695
    %v55 = vpow.pop %v54
    %v56 = vmul.f32 %v53, 1.442695
    %v57 = vpow.pop %v56
    %v58 = vadd.f32 %v55, 1.0
    %v59 = vlog2.pop %v58
    %v60 = vmul.f32 %v59, 0.6931472
    %v61 = vmul.f32 -0.5, %v55
    %v62 = vadd.f32 %v61, 1.0
    %v63 = vmul.f32 %v62, %v55
    %v64 = vand.u32 2147483647, %v55
    %vm65 = vcmp.lt.f32.partialorder %v64, 0.0004427343
    %v66 = vsel %vm65, %v63, %v60
    %v67 = vadd.f32 %v57, 1.0
    %v68 = vlog2.pop %v67
    %v69 = vmul.f32 %v68, 0.6931472
    %v70 = vmul.f32 -0.5, %v57
    %v71 = vadd.f32 %v70, 1.0
    %v72 = vmul.f32 %v71, %v57
    %v73 = vand.u32 2147483647, %v57
    %vm74 = vcmp.lt.f32.partialorder %v73, 0.0004427343
    %v75 = vsel %vm74, %v72, %v69
    %v76 = vadd.f32 %v50, %v51
    %v77 = vrot.slane %v76, 4
    %v78 = vadd.f32 %v76, %v77
    %v79 = vrot.slane %v78, 2
    %v80 = vadd.f32 %v78, %v79
    %v81 = vrot.slane %v80, 1
    %v82 = vadd.f32 %v80, %v81
    %83 = vst [vmem:[#allocation7] sm:$0x1] %v82
    %v84 = vmul.f32 %v50, %v42
    %v85 = vmul.f32 %v51, %v43
    %v86 = vadd.f32 %v84, %v85
    %v87 = vrot.slane %v86, 4
    %v88 = vadd.f32 %v86, %v87
    %v89 = vrot.slane %v88, 2
    %v90 = vadd.f32 %v88, %v89
    %v91 = vrot.slane %v90, 1
    %v92 = vadd.f32 %v90, %v91
    %93 = vst [vmem:[#allocation7 + $0x1] sm:$0x1] %v92
    %v94 = vadd.f32 %v42, %v43
    %v95 = vrot.slane %v94, 4
    %v96 = vadd.f32 %v94, %v95
    %v97 = vrot.slane %v96, 2
    %v98 = vadd.f32 %v96, %v97
    %v99 = vrot.slane %v98, 1
    %v100 = vadd.f32 %v98, %v99
    %101 = vst [vmem:[#allocation7 + $0x2] sm:$0x1] %v100
    %v102 = vadd.f32 %v66, %v75
    %v103 = vrot.slane %v102, 4
    %v104 = vadd.f32 %v102, %v103
    %v105 = vrot.slane %v104, 2
    %v106 = vadd.f32 %v104, %v105
    %v107 = vrot.slane %v106, 1
    %v108 = vadd.f32 %v106, %v107
    %109 = vst [vmem:[#allocation7 + $0x3] sm:$0x1] %v108
    // Predicated region
    $region18: #{tpu_custom_call.1} parent=1 // pred_check
      _
    $region19: #{tpu_custom_call.1} parent=1 // pred_check_branch
      %111 = sbr.rel (0) target = $region21
    $region20: #{tpu_custom_call.1} parent=1 // pred_region
      %s113 = ssub.s32 64, 64
      %114 = vsyncadd [#allocation4], %s113
      %s116 = sshll.u32 [#allocation7], 4
      %s117 = int_to_ptr.vmem [resolvable:$true] %s116
      %119 = dma.vmem_to_hbm [thread:$0]  %s117, 64, %s2, [#allocation4]
    $region21: #{tpu_custom_call.1} parent=1 // pred_fallthru
      _
    // Predicated region
    $region22: #{tpu_custom_call.1} parent=1 // pred_check
      _
    $region23: #{tpu_custom_call.1} parent=1 // pred_check_branch
      %121 = sbr.rel (0) target = $region25
    $region24: #{tpu_custom_call.1} parent=1 // pred_region
      %122 = dma.done [#allocation4], 64
    $region25: #{tpu_custom_call.1} parent=1 // pred_fallthru
      _
    %123 = vsyncpa [#allocation3], 1
    %124 = vsyncpa [#allocation6], 1
    %125 = vsyncpa [#allocation4], 1

</llo_original>
